<compile_context>
chip_gen: v7x
topology: tpu7x:2x2x1
jax: 0.10.0
libtpu: 0.0.40
codegen_flags: <defaults>
</compile_context>

<pallas_src>
import functools

import jax
import jax.numpy as jnp
from jax import lax
from jax.experimental import pallas as pl
from jax.experimental.pallas import tpu as pltpu

VIEWS = ("L-CC", "L-MLO", "R-CC", "R-MLO")

_LANE = 128
_PER_BUF_BYTES = 3 << 20       # per-input VMEM tile budget (Pallas double-buffers it)
_VMEM_LIMIT_BYTES = 40 << 20   # > v5e 16 MiB / v6e 32 MiB defaults, < v7x 64 MiB physical
_MAX_TH = 8192                 # lane-chunk unroll cap in the tiled-hw fallback
_MAX_TR_TILED = 1024           # keeps lane-dense accumulators small in the fallback


def _round_up(x, m):
    return ((x + m - 1) // m) * m


def _cdiv(a, b):
    return (a + b - 1) // b


def _row_multiple(dtype):
    # sublane packing: f32 -> 8 rows, bf16/f16 -> 16, int8/fp8 -> 32
    itemsize = jnp.dtype(dtype).itemsize
    return 8 * max(1, 4 // max(1, itemsize))


def _row_tile(rows, row_mult, tr_cap):
    """Row tile <= tr_cap, multiple of row_mult; prefer >=2 row tiles for megacore."""
    rows_ceil = _round_up(rows, row_mult)
    if rows_ceil > row_mult:
        tr_pref = _round_up(_cdiv(rows, 2), row_mult)
    else:
        tr_pref = row_mult
    return max(row_mult, min(tr_cap, tr_pref, rows_ceil))


def _pool_full_hw_kernel(*refs, n_views, inv_hw):
    """One block covers the whole hw axis: sum + scale, no carry needed."""
    x_refs, o_refs = refs[:n_views], refs[n_views:]
    for x_ref, o_ref in zip(x_refs, o_refs):
        s = jnp.sum(x_ref[...].astype(jnp.float32), axis=-1, keepdims=True)
        o_ref[...] = (s * inv_hw).astype(o_ref.dtype)


def _pool_tiled_hw_kernel(*refs, n_views, inv_hw, hw, th):
    """hw tiled on the trailing 'arbitrary' grid axis; lane-dense f32 accumulators."""
    x_refs = refs[:n_views]
    o_refs = refs[n_views:2 * n_views]
    acc_refs = refs[2 * n_views:]
    k = pl.program_id(1)

    @pl.when(k == 0)
    def _():
        for acc in acc_refs:
            acc[...] = jnp.zeros_like(acc)

    tr = x_refs[0].shape[0]
    if hw % th != 0:
        # Mask the ragged tail of the reduction axis in-kernel (no HBM padding).
        lane = lax.broadcasted_iota(jnp.int32, (tr, th), 1)
        valid = (k * th + lane) < hw
    else:
        valid = None

    for x_ref, acc in zip(x_refs, acc_refs):
        x = x_ref[...].astype(jnp.float32)
        if valid is not None:
            x = jnp.where(valid, x, 0.0)
        # Lane-dense partial sums: full-width VPU adds; XLU reduce deferred to finalize.
        partial = x[:, 0:_LANE]
        for j in range(1, th // _LANE):
            partial = partial + x[:, j * _LANE:(j + 1) * _LANE]
        acc[...] += partial

    @pl.when(k == pl.num_programs(1) - 1)
    def _():
        for acc, o_ref in zip(acc_refs, o_refs):
            s = jnp.sum(acc[...], axis=-1, keepdims=True)
            o_ref[...] = (s * inv_hw).astype(o_ref.dtype)


def _fused_global_avg_pool(slabs):
    """slabs: sequence of same-shape/dtype (rows, hw) arrays -> list of (rows,) means."""
    n_views = len(slabs)
    rows, hw = slabs[0].shape
    dtype = slabs[0].dtype
    itemsize = jnp.dtype(dtype).itemsize
    row_mult = _row_multiple(dtype)
    inv_hw = 1.0 / float(hw)

    max_rows_full = _PER_BUF_BYTES // max(hw * itemsize, 1)
    if max_rows_full >= row_mult:
        # --- common case: full-width hw block, 1-D grid over row tiles ---
        tr_cap = (max_rows_full // row_mult) * row_mult
        tr = _row_tile(rows, row_mult, tr_cap)
        grid = (_cdiv(rows, tr),)
        kernel = functools.partial(_pool_full_hw_kernel, n_views=n_views, inv_hw=inv_hw)
        in_specs = [pl.BlockSpec((tr, hw), lambda i: (i, 0)) for _ in range(n_views)]
        out_specs = tuple(
            pl.BlockSpec((tr, 1), lambda i: (i, 0)) for _ in range(n_views)
        )
        scratch_shapes = []
        dim_sem = ("parallel",)
    else:
        # --- huge-hw fallback: tile hw; accumulate across trailing "arbitrary" axis ---
        th = min(_round_up(hw, _LANE), _MAX_TH)
        tr_cap = max((_PER_BUF_BYTES // (th * itemsize)) // row_mult * row_mult, row_mult)
        tr_cap = min(tr_cap, _MAX_TR_TILED)
        tr = _row_tile(rows, row_mult, tr_cap)
        grid = (_cdiv(rows, tr), _cdiv(hw, th))
        kernel = functools.partial(
            _pool_tiled_hw_kernel, n_views=n_views, inv_hw=inv_hw, hw=hw, th=th
        )
        in_specs = [pl.BlockSpec((tr, th), lambda i, k: (i, k)) for _ in range(n_views)]
        out_specs = tuple(
            pl.BlockSpec((tr, 1), lambda i, k: (i, 0)) for _ in range(n_views)
        )
        scratch_shapes = [pltpu.VMEM((tr, _LANE), jnp.float32) for _ in range(n_views)]
        dim_sem = ("parallel", "arbitrary")

    outs = pl.pallas_call(
        kernel,
        out_shape=tuple(
            jax.ShapeDtypeStruct((rows, 1), dtype) for _ in range(n_views)
        ),
        grid_spec=pltpu.PrefetchScalarGridSpec(
            num_scalar_prefetch=0,
            grid=grid,
            in_specs=in_specs,
            out_specs=out_specs,
            scratch_shapes=scratch_shapes,
        ),
        compiler_params=pltpu.CompilerParams(
            dimension_semantics=dim_sem,
            vmem_limit_bytes=_VMEM_LIMIT_BYTES,
        ),
        cost_estimate=pl.CostEstimate(
            flops=n_views * rows * hw,
            transcendentals=0,
            bytes_accessed=n_views * rows * (hw + 1) * itemsize,
        ),
    )(*slabs)
    return [o[:, 0] for o in outs]


def all_views_avg_pool(x_dict):
    """Equivalent of AllViewsAvgPool.forward: dict of 4 NCHW tensors -> dict of (N, C)."""
    shapes = {tuple(x_dict[v].shape) for v in VIEWS}
    dtypes = {jnp.dtype(x_dict[v].dtype) for v in VIEWS}
    if len(shapes) == 1 and len(dtypes) == 1:
        # Fused path: one pallas_call, four inputs / four outputs, no concat copy.
        n, c, h, w = next(iter(shapes))
        slabs = [x_dict[v].reshape(n * c, h * w) for v in VIEWS]  # reshape is free
        pooled = _fused_global_avg_pool(slabs)
        return {v: p.reshape(n, c) for v, p in zip(VIEWS, pooled)}

    # Fallback: views with heterogeneous shapes/dtypes get independent calls.
    out = {}
    for v in VIEWS:
        n, c, h, w = x_dict[v].shape
        (pooled,) = _fused_global_avg_pool([x_dict[v].reshape(n * c, h * w)])
        out[v] = pooled.reshape(n, c)
    return out


if __name__ == "__main__":
    key = jax.random.PRNGKey(0)
    n, c, h, w = 2, 4, 16, 16
    keys = jax.random.split(key, len(VIEWS))
    x = {
        view: jax.random.normal(k, (n, c, h, w), dtype=jnp.float32)
        for view, k in zip(VIEWS, keys)
    }

    out = all_views_avg_pool(x)
    jax.block_until_ready(out)

    # verify against a plain-JAX reference
    for view in VIEWS:
        ref = jnp.mean(x[view].reshape(n, c, -1), axis=-1)
        assert out[view].shape == (n, c)
        assert jnp.allclose(out[view], ref, atol=1e-5, rtol=1e-5)

    print("KERNEL_OK")
</pallas_src>

<mosaic_0001>
module attributes {stable_mosaic.version = 11 : i64} {
  func.func @_pool_full_hw_kernel(%arg0: i32, %arg1: memref<8x256xf32, #tpu.memory_space<vmem>>, %arg2: memref<8x256xf32, #tpu.memory_space<vmem>>, %arg3: memref<8x256xf32, #tpu.memory_space<vmem>>, %arg4: memref<8x256xf32, #tpu.memory_space<vmem>>, %arg5: memref<8x1xf32, #tpu.memory_space<vmem>>, %arg6: memref<8x1xf32, #tpu.memory_space<vmem>>, %arg7: memref<8x1xf32, #tpu.memory_space<vmem>>, %arg8: memref<8x1xf32, #tpu.memory_space<vmem>>) attributes {dimension_semantics = [#tpu.dimension_semantics<parallel>], iteration_bounds = array<i64: 1>, scalar_prefetch = 0 : i64, scratch_operands = 0 : i64, tpu.core_type = #tpu.core_type<tc>, window_params = [{transform_indices = @transform_0, window_bounds = array<i64: 8, 256>}, {transform_indices = @transform_1, window_bounds = array<i64: 8, 256>}, {transform_indices = @transform_2, window_bounds = array<i64: 8, 256>}, {transform_indices = @transform_3, window_bounds = array<i64: 8, 256>}, {transform_indices = @transform_4, window_bounds = array<i64: 8, 1>}, {transform_indices = @transform_5, window_bounds = array<i64: 8, 1>}, {transform_indices = @transform_6, window_bounds = array<i64: 8, 1>}, {transform_indices = @transform_7, window_bounds = array<i64: 8, 1>}]} {
    %c0 = arith.constant 0 : index
    %c0_0 = arith.constant 0 : index
    %0 = vector.load %arg1[%c0, %c0_0] : memref<8x256xf32, #tpu.memory_space<vmem>>, vector<8x256xf32>
    %cst = arith.constant dense<0.000000e+00> : vector<8xf32>
    %1 = vector.multi_reduction <add>, %0, %cst [1] : vector<8x256xf32> to vector<8xf32>
    %2 = vector.shape_cast %1 : vector<8xf32> to vector<8x1xf32>
    %cst_1 = arith.constant 3.906250e-03 : f32
    %3 = vector.broadcast %cst_1 : f32 to vector<8x1xf32>
    %4 = arith.mulf %2, %3 : vector<8x1xf32>
    %c0_2 = arith.constant 0 : index
    %c0_3 = arith.constant 0 : index
    %5 = vector.load %arg5[%c0_2, %c0_3] : memref<8x1xf32, #tpu.memory_space<vmem>>, vector<8x1xf32>
    tpu.vector_store %arg5[%c0_2, %c0_3], %4 {strides = array<i32>} : memref<8x1xf32, #tpu.memory_space<vmem>>, vector<8x1xf32>,
    %c0_4 = arith.constant 0 : index
    %c0_5 = arith.constant 0 : index
    %6 = vector.load %arg2[%c0_4, %c0_5] : memref<8x256xf32, #tpu.memory_space<vmem>>, vector<8x256xf32>
    %cst_6 = arith.constant dense<0.000000e+00> : vector<8xf32>
    %7 = vector.multi_reduction <add>, %6, %cst_6 [1] : vector<8x256xf32> to vector<8xf32>
    %8 = vector.shape_cast %7 : vector<8xf32> to vector<8x1xf32>
    %cst_7 = arith.constant 3.906250e-03 : f32
    %9 = vector.broadcast %cst_7 : f32 to vector<8x1xf32>
    %10 = arith.mulf %8, %9 : vector<8x1xf32>
    %c0_8 = arith.constant 0 : index
    %c0_9 = arith.constant 0 : index
    %11 = vector.load %arg6[%c0_8, %c0_9] : memref<8x1xf32, #tpu.memory_space<vmem>>, vector<8x1xf32>
    tpu.vector_store %arg6[%c0_8, %c0_9], %10 {strides = array<i32>} : memref<8x1xf32, #tpu.memory_space<vmem>>, vector<8x1xf32>,
    %c0_10 = arith.constant 0 : index
    %c0_11 = arith.constant 0 : index
    %12 = vector.load %arg3[%c0_10, %c0_11] : memref<8x256xf32, #tpu.memory_space<vmem>>, vector<8x256xf32>
    %cst_12 = arith.constant dense<0.000000e+00> : vector<8xf32>
    %13 = vector.multi_reduction <add>, %12, %cst_12 [1] : vector<8x256xf32> to vector<8xf32>
    %14 = vector.shape_cast %13 : vector<8xf32> to vector<8x1xf32>
    %cst_13 = arith.constant 3.906250e-03 : f32
    %15 = vector.broadcast %cst_13 : f32 to vector<8x1xf32>
    %16 = arith.mulf %14, %15 : vector<8x1xf32>
    %c0_14 = arith.constant 0 : index
    %c0_15 = arith.constant 0 : index
    %17 = vector.load %arg7[%c0_14, %c0_15] : memref<8x1xf32, #tpu.memory_space<vmem>>, vector<8x1xf32>
    tpu.vector_store %arg7[%c0_14, %c0_15], %16 {strides = array<i32>} : memref<8x1xf32, #tpu.memory_space<vmem>>, vector<8x1xf32>,
    %c0_16 = arith.constant 0 : index
    %c0_17 = arith.constant 0 : index
    %18 = vector.load %arg4[%c0_16, %c0_17] : memref<8x256xf32, #tpu.memory_space<vmem>>, vector<8x256xf32>
    %cst_18 = arith.constant dense<0.000000e+00> : vector<8xf32>
    %19 = vector.multi_reduction <add>, %18, %cst_18 [1] : vector<8x256xf32> to vector<8xf32>
    %20 = vector.shape_cast %19 : vector<8xf32> to vector<8x1xf32>
    %cst_19 = arith.constant 3.906250e-03 : f32
    %21 = vector.broadcast %cst_19 : f32 to vector<8x1xf32>
    %22 = arith.mulf %20, %21 : vector<8x1xf32>
    %c0_20 = arith.constant 0 : index
    %c0_21 = arith.constant 0 : index
    %23 = vector.load %arg8[%c0_20, %c0_21] : memref<8x1xf32, #tpu.memory_space<vmem>>, vector<8x1xf32>
    tpu.vector_store %arg8[%c0_20, %c0_21], %22 {strides = array<i32>} : memref<8x1xf32, #tpu.memory_space<vmem>>, vector<8x1xf32>,
    return
  }
  func.func @transform_0(%arg0: i32) -> (i32, i32) {
    %c0_i32 = arith.constant 0 : i32
    %c0_i32_0 = arith.constant 0 : i32
    return %arg0, %c0_i32 : i32, i32
  }
  func.func @transform_1(%arg0: i32) -> (i32, i32) {
    %c0_i32 = arith.constant 0 : i32
    %c0_i32_0 = arith.constant 0 : i32
    return %arg0, %c0_i32 : i32, i32
  }
  func.func @transform_2(%arg0: i32) -> (i32, i32) {
    %c0_i32 = arith.constant 0 : i32
    %c0_i32_0 = arith.constant 0 : i32
    return %arg0, %c0_i32 : i32, i32
  }
  func.func @transform_3(%arg0: i32) -> (i32, i32) {
    %c0_i32 = arith.constant 0 : i32
    %c0_i32_0 = arith.constant 0 : i32
    return %arg0, %c0_i32 : i32, i32
  }
  func.func @transform_4(%arg0: i32) -> (i32, i32) {
    %c0_i32 = arith.constant 0 : i32
    %c0_i32_0 = arith.constant 0 : i32
    return %arg0, %c0_i32 : i32, i32
  }
  func.func @transform_5(%arg0: i32) -> (i32, i32) {
    %c0_i32 = arith.constant 0 : i32
    %c0_i32_0 = arith.constant 0 : i32
    return %arg0, %c0_i32 : i32, i32
  }
  func.func @transform_6(%arg0: i32) -> (i32, i32) {
    %c0_i32 = arith.constant 0 : i32
    %c0_i32_0 = arith.constant 0 : i32
    return %arg0, %c0_i32 : i32, i32
  }
  func.func @transform_7(%arg0: i32) -> (i32, i32) {
    %c0_i32 = arith.constant 0 : i32
    %c0_i32_0 = arith.constant 0 : i32
    return %arg0, %c0_i32 : i32, i32
  }
}

</mosaic_0001>

<llo_original>
// kernel: tpu_custom_call.1
$region0: #{tpu_custom_call.1}
  #allocation0 [shape = 'u32[]', space=smem, size = 0x4, offset = 0x4, fixed_abs, tag = 'smem constant byte address 0x4 - core index']
  #allocation1 [shape = 'u32[144,128]{1,0:T(1,128)}', space=vmem, size = 0x12000, scoped, tag = 'internal scratch']
  %s0 = inlined_call_operand.hbm [shape: f32[8,256], index: 0, kind: input, shape index: {}]
  %s1 = inlined_call_operand.hbm [shape: f32[8,256], index: 1, kind: input, shape index: {}]
  %s2 = inlined_call_operand.hbm [shape: f32[8,256], index: 2, kind: input, shape index: {}]
  %s3 = inlined_call_operand.hbm [shape: f32[8,256], index: 3, kind: input, shape index: {}]
  %s4 = inlined_call_operand.vmem [shape: f32[8,1], index: 4, kind: output, shape index: {0}]
  %s5 = inlined_call_operand.vmem [shape: f32[8,1], index: 5, kind: output, shape index: {1}]
  %s6 = inlined_call_operand.vmem [shape: f32[8,1], index: 6, kind: output, shape index: {2}]
  %s7 = inlined_call_operand.vmem [shape: f32[8,1], index: 7, kind: output, shape index: {3}]
  %8 = xla_tuple %s4, %s5, %s6, %s7
  %s9 = sld [smem:[#allocation0]]
  $region66: #{tpu_custom_call.1} parent=0
    _
  %s11 = ssub.s32 1, %s9
  %s12 = scalar_select 0, %s11, %s9
  $region1: #{tpu_custom_call.1} parent=0
    #allocation2 [shape = 'u8[8192]{0}', space=vmem, size = 0x2000, scoped, tag = 'input window, operand 0, single buffered']
    #allocation3 [shape = 's32[1]{0}', space=sflag, size = 0x4, scoped, tag = 'scoped memory for tpu_custom_call.1']
    #allocation4 [shape = 'u8[8192]{0}', space=vmem, size = 0x2000, scoped, tag = 'input window, operand 1, single buffered']
    #allocation5 [shape = 's32[1]{0}', space=sflag, size = 0x4, scoped, tag = 'scoped memory for tpu_custom_call.1']
    #allocation6 [shape = 'u8[8192]{0}', space=vmem, size = 0x2000, scoped, tag = 'input window, operand 2, single buffered']
    #allocation7 [shape = 'u8[8192]{0}', space=vmem, size = 0x2000, scoped, tag = 'input window, operand 3, single buffered']
    #allocation8 [shape = 's32[1]{0}', space=sflag, size = 0x4, scoped, tag = 'scoped memory for tpu_custom_call.1']
    %13 = vsyncpa [#allocation3], 0
    %14 = vsyncpa [#allocation5], 0
    %15 = vsyncpa [#allocation8], 0
    // Predicated region
    $region2: #{tpu_custom_call.1} parent=1 // pred_check
      _
    $region3: #{tpu_custom_call.1} parent=1 // pred_check_branch
      %17 = sbr.rel (0) target = $region5
    $region4: #{tpu_custom_call.1} parent=1 // pred_region
      %s19 = ssub.s32 256, 256
      %20 = vsyncadd [#allocation3], %s19
      %s22 = sshll.u32 [#allocation2], 4
      %s23 = int_to_ptr.vmem [resolvable:$true] %s22
      %25 = dma.hbm_to_vmem [thread:$0]  %s0, 256, %s23, [#allocation3]
    $region5: #{tpu_custom_call.1} parent=1 // pred_fallthru
      _
    // Predicated region
    $region6: #{tpu_custom_call.1} parent=1 // pred_check
      _
    $region7: #{tpu_custom_call.1} parent=1 // pred_check_branch
      %27 = sbr.rel (0) target = $region9
    $region8: #{tpu_custom_call.1} parent=1 // pred_region
      %s29 = ssub.s32 256, 256
      %30 = vsyncadd [#allocation5], %s29
      %s32 = sshll.u32 [#allocation4], 4
      %s33 = int_to_ptr.vmem [resolvable:$true] %s32
      %35 = dma.hbm_to_vmem [thread:$0]  %s1, 256, %s33, [#allocation5]
    $region9: #{tpu_custom_call.1} parent=1 // pred_fallthru
      _
    // Predicated region
    $region10: #{tpu_custom_call.1} parent=1 // pred_check
      _
    $region11: #{tpu_custom_call.1} parent=1 // pred_check_branch
      %37 = sbr.rel (0) target = $region13
    $region12: #{tpu_custom_call.1} parent=1 // pred_region
      %s39 = ssub.s32 256, 256
      %40 = vsyncadd [#allocation5], %s39
      %s42 = sshll.u32 [#allocation6], 4
      %s43 = int_to_ptr.vmem [resolvable:$true] %s42
      %45 = dma.hbm_to_vmem [thread:$0]  %s2, 256, %s43, [#allocation5]
    $region13: #{tpu_custom_call.1} parent=1 // pred_fallthru
      _
    // Predicated region
    $region14: #{tpu_custom_call.1} parent=1 // pred_check
      _
    $region15: #{tpu_custom_call.1} parent=1 // pred_check_branch
      %47 = sbr.rel (0) target = $region17
    $region16: #{tpu_custom_call.1} parent=1 // pred_region
      %s49 = ssub.s32 256, 256
      %50 = vsyncadd [#allocation8], %s49
      %s52 = sshll.u32 [#allocation7], 4
      %s53 = int_to_ptr.vmem [resolvable:$true] %s52
      %55 = dma.hbm_to_vmem [thread:$0]  %s3, 256, %s53, [#allocation8]
    $region17: #{tpu_custom_call.1} parent=1 // pred_fallthru
      _
    // Predicated region
    $region18: #{tpu_custom_call.1} parent=1 // pred_check
      _
    $region19: #{tpu_custom_call.1} parent=1 // pred_check_branch
      %57 = sbr.rel (0) target = $region21
    $region20: #{tpu_custom_call.1} parent=1 // pred_region
      %58 = dma.done [#allocation3], 256
    $region21: #{tpu_custom_call.1} parent=1 // pred_fallthru
      _
    // Predicated region
    $region22: #{tpu_custom_call.1} parent=1 // pred_check
      _
    $region23: #{tpu_custom_call.1} parent=1 // pred_check_branch
      %60 = sbr.rel (0) target = $region25
    $region24: #{tpu_custom_call.1} parent=1 // pred_region
      %61 = dma.done [#allocation5], 256
    $region25: #{tpu_custom_call.1} parent=1 // pred_fallthru
      _
    // Predicated region
    $region26: #{tpu_custom_call.1} parent=1 // pred_check
      _
    $region27: #{tpu_custom_call.1} parent=1 // pred_check_branch
      %63 = sbr.rel (0) target = $region29
    $region28: #{tpu_custom_call.1} parent=1 // pred_region
      %64 = dma.done [#allocation5], 256
    $region29: #{tpu_custom_call.1} parent=1 // pred_fallthru
      _
    // Predicated region
    $region30: #{tpu_custom_call.1} parent=1 // pred_check
      _
    $region31: #{tpu_custom_call.1} parent=1 // pred_check_branch
      %66 = sbr.rel (0) target = $region33
    $region32: #{tpu_custom_call.1} parent=1 // pred_region
      %67 = dma.done [#allocation8], 256
    $region33: #{tpu_custom_call.1} parent=1 // pred_fallthru
      _
    %v68 = vld [vmem:[#allocation2] sm:$0xff]
    %v69 = vld [vmem:[#allocation2 + $0x8] sm:$0xff]
    %v70 = vadd.f32 %v68, %v69
    %71 = vadd.xlane.f32.xlu0 %v70
    %v72 = vpop.xlane.xlu0 %71
    %v73 = vmul.f32 %v72, 0.00390625
    %vm74 = vcmask 7168
    %75 = vst.msk [vmem:[%s4] sm:$0xff] %vm74, %v73
    %v76 = vld [vmem:[#allocation4] sm:$0xff]
    %v77 = vld [vmem:[#allocation4 + $0x8] sm:$0xff]
    %v78 = vadd.f32 %v76, %v77
    %79 = vadd.xlane.f32.xlu0 %v78
    %v80 = vpop.xlane.xlu0 %79
    %v81 = vmul.f32 %v80, 0.00390625
    %82 = vst.msk [vmem:[%s5] sm:$0xff] %vm74, %v81
    %v83 = vld [vmem:[#allocation6] sm:$0xff]
    %v84 = vld [vmem:[#allocation6 + $0x8] sm:$0xff]
    %v85 = vadd.f32 %v83, %v84
    %86 = vadd.xlane.f32.xlu0 %v85
    %v87 = vpop.xlane.xlu0 %86
    %v88 = vmul.f32 %v87, 0.00390625
    %89 = vst.msk [vmem:[%s6] sm:$0xff] %vm74, %v88
    %v90 = vld [vmem:[#allocation7] sm:$0xff]
    %v91 = vld [vmem:[#allocation7 + $0x8] sm:$0xff]
    %v92 = vadd.f32 %v90, %v91
    %93 = vadd.xlane.f32.xlu0 %v92
    %v94 = vpop.xlane.xlu0 %93
    %v95 = vmul.f32 %v94, 0.00390625
    %96 = vst.msk [vmem:[%s7] sm:$0xff] %vm74, %v95
    // Predicated region
    $region34: #{tpu_custom_call.1} parent=1 // pred_check
      _
    $region35: #{tpu_custom_call.1} parent=1 // pred_check_branch
      %98 = sbr.rel (0) target = $region37
    $region36: #{tpu_custom_call.1} parent=1 // pred_region
      _
    $region37: #{tpu_custom_call.1} parent=1 // pred_fallthru
      _
    // Predicated region
    $region38: #{tpu_custom_call.1} parent=1 // pred_check
      _
    $region39: #{tpu_custom_call.1} parent=1 // pred_check_branch
      %100 = sbr.rel (0) target = $region41
    $region40: #{tpu_custom_call.1} parent=1 // pred_region
      _
    $region41: #{tpu_custom_call.1} parent=1 // pred_fallthru
      _
    // Predicated region
    $region42: #{tpu_custom_call.1} parent=1 // pred_check
      _
    $region43: #{tpu_custom_call.1} parent=1 // pred_check_branch
      %102 = sbr.rel (0) target = $region45
    $region44: #{tpu_custom_call.1} parent=1 // pred_region
      _
    $region45: #{tpu_custom_call.1} parent=1 // pred_fallthru
      _
    // Predicated region
    $region46: #{tpu_custom_call.1} parent=1 // pred_check
      _
    $region47: #{tpu_custom_call.1} parent=1 // pred_check_branch
      %104 = sbr.rel (0) target = $region49
    $region48: #{tpu_custom_call.1} parent=1 // pred_region
      _
    $region49: #{tpu_custom_call.1} parent=1 // pred_fallthru
      _
    // Predicated region
    $region50: #{tpu_custom_call.1} parent=1 // pred_check
      _
    $region51: #{tpu_custom_call.1} parent=1 // pred_check_branch
      %106 = sbr.rel (0) target = $region53
    $region52: #{tpu_custom_call.1} parent=1 // pred_region
      _
    $region53: #{tpu_custom_call.1} parent=1 // pred_fallthru
      _
    // Predicated region
    $region54: #{tpu_custom_call.1} parent=1 // pred_check
      _
    $region55: #{tpu_custom_call.1} parent=1 // pred_check_branch
      %108 = sbr.rel (0) target = $region57
    $region56: #{tpu_custom_call.1} parent=1 // pred_region
      _
    $region57: #{tpu_custom_call.1} parent=1 // pred_fallthru
      _
    // Predicated region
    $region58: #{tpu_custom_call.1} parent=1 // pred_check
      _
    $region59: #{tpu_custom_call.1} parent=1 // pred_check_branch
      %110 = sbr.rel (0) target = $region61
    $region60: #{tpu_custom_call.1} parent=1 // pred_region
      _
    $region61: #{tpu_custom_call.1} parent=1 // pred_fallthru
      _
    // Predicated region
    $region62: #{tpu_custom_call.1} parent=1 // pred_check
      _
    $region63: #{tpu_custom_call.1} parent=1 // pred_check_branch
      %112 = sbr.rel (0) target = $region65
    $region64: #{tpu_custom_call.1} parent=1 // pred_region
      _
    $region65: #{tpu_custom_call.1} parent=1 // pred_fallthru
      _
    %113 = vsyncpa [#allocation3], 1
    %114 = vsyncpa [#allocation5], 1
    %115 = vsyncpa [#allocation8], 1

</llo_original>
